<compile_context>
chip_gen: v5e
topology: v5e:2x2
jax: 0.10.0
libtpu: 0.0.40
codegen_flags: <defaults>
</compile_context>

<pallas_src>
import functools

import jax
import jax.numpy as jnp
from jax.experimental import pallas as pl
from jax.experimental.pallas import tpu as pltpu


def _round_up(x: int, m: int) -> int:
    return ((x + m - 1) // m) * m


def _choose_row_block(batch: int, seq_len: int, itemsize: int) -> int:
    """Rows per grid step: ~8 MiB input block (double-buffered ~16 MiB)."""
    budget_bytes = 8 * 1024 * 1024
    tb = budget_bytes // max(1, seq_len * itemsize)
    tb = max(128, min(2048, (tb // 128) * 128))
    # Guarantee >= 2 grid blocks when the batch allows it, so the "parallel" grid
    # axis can be sharded across v7x's two TensorCores (no effect on v5e/v6e).
    if batch >= 256:
        tb = min(tb, _round_up((batch + 1) // 2, 128))
    return max(128, tb)


def _choose_seq_chunk(tb: int) -> int:
    """Lanes per in-kernel chunk: bounds each live f32 temporary to ~2 MiB."""
    lanes = (2 * 1024 * 1024) // max(1, tb * 4)
    return max(128, min(1024, (lanes // 128) * 128))


def _monotone_loss_kernel(seq_ref, out_ref, *, inv_tau, seq_len, chunk):
    # seq_ref: (TB, L) block in VMEM ; out_ref: (1, TB) block in VMEM.
    tb = seq_ref.shape[0]
    n_diffs = seq_len - 1
    n_full = n_diffs // chunk
    rem = n_diffs - n_full * chunk

    def partial_rowsum(a, b):
        # d over `width` diff columns; stable softplus: 2 transcendentals / elem.
        d = (b.astype(jnp.float32) - a.astype(jnp.float32)) * inv_tau
        val = jnp.maximum(d, 0.0) + jnp.log1p(jnp.exp(-jnp.abs(d)))   # (TB, width)
        w_row = jnp.ones((1, val.shape[1]), jnp.float32)
        # (1, width) x (TB, width)^T -> lane-dense (1, TB) on the otherwise-idle MXU:
        # one op does the row-sum and the sublane->lane relayout, so the output store
        # is a full-width vst instead of a width-1 masked store.
        return jax.lax.dot_general(
            w_row, val,
            dimension_numbers=(((1,), (1,)), ((), ())),
            preferred_element_type=jnp.float32,
        )

    acc = jnp.zeros((1, tb), jnp.float32)

    if n_full > 0:
        def body(i, acc):
            start = pl.multiple_of(i * chunk, chunk)
            a = seq_ref[:, pl.ds(start, chunk)]        # lane-aligned slice
            b = seq_ref[:, pl.ds(start + 1, chunk)]    # one XLU rotate per chunk
            return acc + partial_rowsum(a, b)
        acc = jax.lax.fori_loop(0, n_full, body, acc)

    if rem > 0:                                        # static tail (< chunk lanes)
        start = n_full * chunk
        a = seq_ref[:, pl.ds(start, rem)]
        b = seq_ref[:, pl.ds(start + 1, rem)]
        acc = acc + partial_rowsum(a, b)

    out_ref[...] = (acc * (1.0 / n_diffs)).astype(out_ref.dtype)


def monotone_loss(seq: jax.Array, tau: float = 0.1, *,
                  row_block: int | None = None,
                  seq_chunk: int | None = None) -> jax.Array:
    """seq: (B, L) float array. Returns (B,), matching torch's dim=1 reduce."""
    B, L = seq.shape
    assert L >= 2, "need at least 2 sequence elements for a diff"
    out_dtype = seq.dtype
    itemsize = jnp.dtype(seq.dtype).itemsize

    tb = row_block if row_block is not None else _choose_row_block(B, L, itemsize)

    # Tiny-batch case only: shrink the single block to the (8-rounded) batch and pad
    # a handful of rows, so the block never exceeds the array extent.  For B >= tb we
    # run on the unpadded array; the ragged last block's extra rows only feed output
    # entries that are sliced off below (each output mixes only within its own row).
    b_work = B
    if tb > B:
        tb = _round_up(B, 8)
        b_work = tb
        if b_work != B:
            seq = jnp.pad(seq, ((0, b_work - B), (0, 0)))   # <= 7 rows; negligible

    nb = pl.cdiv(b_work, tb)
    chunk = seq_chunk if seq_chunk is not None else _choose_seq_chunk(tb)

    kernel = functools.partial(
        _monotone_loss_kernel,
        inv_tau=float(1.0 / tau),
        seq_len=L,
        chunk=chunk,
    )

    # VMEM budget: double-buffered input block + double-buffered output row +
    # chunk-sized f32 intermediates, with headroom; capped at v7x's 64 MiB physical.
    chunk_eff = min(chunk, max(L - 1, 1))
    block_in = tb * L * itemsize
    block_out = tb * jnp.dtype(out_dtype).itemsize
    interm = 6 * tb * chunk_eff * 4
    vmem_limit = int(min(64 * 1024 * 1024,
                         max(32 * 1024 * 1024,
                             int((2 * block_in + 2 * block_out + interm) * 1.3))))

    out = pl.pallas_call(
        kernel,
        out_shape=jax.ShapeDtypeStruct((nb, tb), out_dtype),
        grid_spec=pltpu.PrefetchScalarGridSpec(
            num_scalar_prefetch=0,
            grid=(nb,),
            in_specs=[pl.BlockSpec((tb, L), lambda b: (b, 0))],
            out_specs=pl.BlockSpec((1, tb), lambda b: (b, 0)),
        ),
        compiler_params=pltpu.CompilerParams(
            dimension_semantics=("parallel",),
            vmem_limit_bytes=vmem_limit,
        ),
    )(seq)

    return out.reshape(-1)[:B]


def monotone_loss_ref(seq: jax.Array, tau: float = 0.1) -> jax.Array:
    """Pure-JAX reference mirroring the PyTorch forward exactly."""
    exp_diff = jnp.exp(-jnp.diff(seq / tau, axis=1))
    return jnp.mean(-jnp.log(exp_diff / (exp_diff + 1.0)), axis=1)


if __name__ == "__main__":
    key = jax.random.PRNGKey(0)
    k1, k2, k3 = jax.random.split(key, 3)

    # Small demo shape consistent with the module: batch=2, sequence length=8.
    B, L = 2, 8
    seq = jax.random.normal(k1, (B, L), dtype=jnp.float32)
    out = jax.block_until_ready(monotone_loss(seq, tau=0.1))
    ref = monotone_loss_ref(seq, tau=0.1)
    assert out.shape == (B,)
    assert jnp.allclose(out, ref, atol=1e-4, rtol=1e-4), (out, ref)

    # Multi-block grid with a ragged (unpadded) last block.
    B2, L2 = 300, 16
    seq2 = jax.random.normal(k2, (B2, L2), dtype=jnp.float32)
    out2 = jax.block_until_ready(monotone_loss(seq2, tau=0.5, row_block=128))
    ref2 = monotone_loss_ref(seq2, tau=0.5)
    assert out2.shape == (B2,)
    assert jnp.allclose(out2, ref2, atol=1e-4, rtol=1e-4), float(
        jnp.max(jnp.abs(out2 - ref2)))

    # Exercises the chunked fori_loop path (2 full chunks + remainder tail).
    B3, L3 = 4, 384
    seq3 = jax.random.normal(k3, (B3, L3), dtype=jnp.float32)
    out3 = jax.block_until_ready(monotone_loss(seq3, tau=0.1, seq_chunk=128))
    ref3 = monotone_loss_ref(seq3, tau=0.1)
    assert out3.shape == (B3,)
    assert jnp.allclose(out3, ref3, atol=1e-4, rtol=1e-4), float(
        jnp.max(jnp.abs(out3 - ref3)))

    print("KERNEL_OK")
</pallas_src>

<mosaic_0001>
module attributes {stable_mosaic.version = 11 : i64} {
  func.func @_monotone_loss_kernel(%arg0: i32, %arg1: memref<8x8xf32, #tpu.memory_space<vmem>>, %arg2: memref<1x8xf32, #tpu.memory_space<vmem>>) attributes {dimension_semantics = [#tpu.dimension_semantics<parallel>], iteration_bounds = array<i64: 1>, scalar_prefetch = 0 : i64, scratch_operands = 0 : i64, tpu.core_type = #tpu.core_type<tc>, window_params = [{transform_indices = @transform_0, window_bounds = array<i64: 8, 8>}, {transform_indices = @transform_1, window_bounds = array<i64: 1, 8>}]} {
    %cst = arith.constant 0.000000e+00 : f32
    %0 = vector.broadcast %cst : f32 to vector<1x8xf32>
    %c0 = arith.constant 0 : index
    %c0_0 = arith.constant 0 : index
    %1 = vector.load %arg1[%c0, %c0_0] : memref<8x8xf32, #tpu.memory_space<vmem>>, vector<8x7xf32>
    %c0_1 = arith.constant 0 : index
    %c1 = arith.constant 1 : index
    %2 = vector.load %arg1[%c0_1, %c1] : memref<8x8xf32, #tpu.memory_space<vmem>>, vector<8x7xf32>
    %3 = arith.subf %2, %1 : vector<8x7xf32>
    %cst_2 = arith.constant 1.000000e+01 : f32
    %4 = vector.broadcast %cst_2 : f32 to vector<8x7xf32>
    %5 = arith.mulf %3, %4 : vector<8x7xf32>
    %cst_3 = arith.constant 0.000000e+00 : f32
    %6 = vector.broadcast %cst_3 : f32 to vector<8x7xf32>
    %7 = arith.maximumf %5, %6 : vector<8x7xf32>
    %8 = math.absf %5 : vector<8x7xf32>
    %cst_4 = arith.constant 0.000000e+00 : f32
    %9 = vector.broadcast %cst_4 : f32 to vector<8x7xf32>
    %10 = arith.subf %9, %8 : vector<8x7xf32>
    %11 = math.exp %10 : vector<8x7xf32>
    %12 = math.log1p %11 : vector<8x7xf32>
    %13 = arith.addf %7, %12 : vector<8x7xf32>
    %cst_5 = arith.constant 1.000000e+00 : f32
    %14 = vector.broadcast %cst_5 : f32 to vector<1x7xf32>
    %cst_6 = arith.constant dense<0.000000e+00> : vector<1x8xf32>
    %15 = tpu.matmul %14, %13, %cst_6 {dimension_numbers = #tpu.dot_dimension_numbers<[1], [1], [0], [0], [0, 0, 1, 0], [], []>} : vector<1x7xf32>, vector<8x7xf32>, vector<1x8xf32> -> vector<1x8xf32>
    %16 = arith.addf %0, %15 : vector<1x8xf32>
    %cst_7 = arith.constant 0.142857149 : f32
    %17 = vector.broadcast %cst_7 : f32 to vector<1x8xf32>
    %18 = arith.mulf %16, %17 : vector<1x8xf32>
    %c0_8 = arith.constant 0 : index
    %c0_9 = arith.constant 0 : index
    %19 = vector.load %arg2[%c0_8, %c0_9] : memref<1x8xf32, #tpu.memory_space<vmem>>, vector<1x8xf32>
    tpu.vector_store %arg2[%c0_8, %c0_9], %18 {strides = array<i32>} : memref<1x8xf32, #tpu.memory_space<vmem>>, vector<1x8xf32>,
    return
  }
  func.func @transform_0(%arg0: i32) -> (i32, i32) {
    %c0_i32 = arith.constant 0 : i32
    %c0_i32_0 = arith.constant 0 : i32
    return %arg0, %c0_i32 : i32, i32
  }
  func.func @transform_1(%arg0: i32) -> (i32, i32) {
    %c0_i32 = arith.constant 0 : i32
    %c0_i32_0 = arith.constant 0 : i32
    return %arg0, %c0_i32 : i32, i32
  }
}

</mosaic_0001>

<llo_original>
// kernel: tpu_custom_call.1
$region0: #{tpu_custom_call.1}
  #allocation0 [shape = 'u32[]', space=smem, size = 0x4, offset = 0x4, fixed_abs, tag = 'smem constant byte address 0x4 - core index']
  #allocation1 [shape = 'u32[72,128]{1,0:T(1,128)}', space=vmem, size = 0x9000, scoped, tag = 'internal scratch']
  %s0 = inlined_call_operand.hbm [shape: f32[8,8], index: 0, kind: input, shape index: {}]
  %s1 = inlined_call_operand.hbm [shape: f32[1,8], index: 1, kind: output, shape index: {}]
  %s2 = sld [smem:[#allocation0]]
  $region18: #{tpu_custom_call.1} parent=0
    _
  %s4 = ssub.s32 1, %s2
  %s5 = scalar_select 0, %s4, %s2
  $region1: #{tpu_custom_call.1} parent=0
    #allocation2 [shape = 'u8[4096]{0}', space=vmem, size = 0x1000, scoped, tag = 'input window, operand 0, single buffered']
    #allocation3 [shape = 's32[1]{0}', space=sflag, size = 0x4, scoped, tag = 'scoped memory for tpu_custom_call.1']
    #allocation4 [shape = 's32[1]{0}', space=sflag, size = 0x4, scoped, tag = 'scoped memory for tpu_custom_call.1']
    #allocation5 [shape = 'u8[512]{0}', space=vmem, size = 0x400, scoped, tag = 'output window, operand 0, single buffered']
    %6 = vsyncpa [#allocation3], 0
    %7 = vsyncpa [#allocation4], 0
    // Predicated region
    $region2: #{tpu_custom_call.1} parent=1 // pred_check
      _
    $region3: #{tpu_custom_call.1} parent=1 // pred_check_branch
      %9 = sbr.rel (0) target = $region5
    $region4: #{tpu_custom_call.1} parent=1 // pred_region
      %11 = vsyncadd [#allocation3], 0
      %s13 = sshll.u32 %s0, 4
      %s14 = int_to_ptr.hbm [resolvable:$true] %s13
      %s15 = sshll.u32 [#allocation2], 4
      %s16 = int_to_ptr.vmem [resolvable:$true] %s15
      %18 = dma.hbm_to_vmem [thread:$0]  %s14, 128, %s16, [#allocation3]
    $region5: #{tpu_custom_call.1} parent=1 // pred_fallthru
      _
    // Predicated region
    $region6: #{tpu_custom_call.1} parent=1 // pred_check
      _
    $region7: #{tpu_custom_call.1} parent=1 // pred_check_branch
      %20 = sbr.rel (0) target = $region9
    $region8: #{tpu_custom_call.1} parent=1 // pred_region
      %22 = dma.done [#allocation3], 128
    $region9: #{tpu_custom_call.1} parent=1 // pred_fallthru
      _
    %v23 = vld [vmem:[#allocation2] sm:$0xff]
    %25 = vrot.lane.b32.xlu0 %v23, 1
    %v26 = vpop.permute.xlu0 %25
    %v28 = vsub.f32 %v23, %v26
    %v29 = vmul.f32 %v28, 10.0
    %v30 = vmax.f32 %v29, 0.0
    %v31 = vand.u32 2147483647, %v29
    %v32 = vsub.f32 0.0, %v31
    %v33 = vmul.f32 %v32, 1.442695
    %v34 = vpow.pop %v33
    %v35 = vadd.f32 %v34, 1.0
    %v36 = vlog2.pop %v35
    %v37 = vmul.f32 %v36, 0.6931472
    %v38 = vmul.f32 -0.5, %v34
    %v39 = vadd.f32 %v38, 1.0
    %v40 = vmul.f32 %v39, %v34
    %v41 = vand.u32 2147483647, %v34
    %vm42 = vcmp.lt.f32.partialorder %v41, 0.0004427343
    %v43 = vsel %vm42, %v40, %v37
    %v44 = vadd.f32 %v30, %v43
    %46 = vrot.lane.b32.xlu0 %v44, 127
    %v47 = vpop.permute.xlu0 %46
    %vm48 = vcmask 56320
    %v50 = vsel %vm48, 1.0, 0
    %v52 = vsel %vm48, %v47, 0
    %54 = vmatpush.xpose.msra.mxu0 0.0
    %55 = vmatpush.xpose.msra.mxu0 0.0
    %56 = vmatpush.xpose.msra.mxu0 0.0
    %57 = vmatpush.xpose.msra.mxu0 0.0
    %58 = vmatpush.xpose.msra.mxu0 0.0
    %59 = vmatpush.xpose.msra.mxu0 0.0
    %60 = vmatpush.xpose.msra.mxu0 0.0
    %61 = vmatpush.xpose.msra.mxu0 0.0
    %62 = vmatpush.xpose.msra.mxu0 0.0
    %63 = vmatpush.xpose.msra.mxu0 0.0
    %64 = vmatpush.xpose.msra.mxu0 0.0
    %65 = vmatpush.xpose.msra.mxu0 0.0
    %66 = vmatpush.xpose.msra.mxu0 0.0
    %67 = vmatpush.xpose.msra.mxu0 0.0
    %68 = vmatpush.xpose.msra.mxu0 0.0
    %69 = vmatpush.xpose.msra.mxu0 %v52
    %70 = vmatmul.f32.gmra.mxu0 %v50
    %v71 = vpop.f32.mrf.mxu0
    %v72 = vadd.f32 0.0, %v71
    %73 = vdwg.mxu0
    %v74 = vmul.f32 %v72, 0.14285715
    %vm75 = vcmask 57344
    %76 = vst.msk [vmem:[#allocation5] sm:$0x1] %vm75, %v74
    // Predicated region
    $region10: #{tpu_custom_call.1} parent=1 // pred_check
      _
    $region11: #{tpu_custom_call.1} parent=1 // pred_check_branch
      %78 = sbr.rel (0) target = $region13
    $region12: #{tpu_custom_call.1} parent=1 // pred_region
      %80 = vsyncadd [#allocation4], 0
      %s82 = sshll.u32 [#allocation5], 4
      %s83 = int_to_ptr.vmem [resolvable:$true] %s82
      %s84 = sshll.u32 %s1, 4
      %s85 = int_to_ptr.hbm [resolvable:$true] %s84
      %87 = dma.vmem_to_hbm [thread:$0]  %s83, 16, %s85, [#allocation4]
    $region13: #{tpu_custom_call.1} parent=1 // pred_fallthru
      _
    // Predicated region
    $region14: #{tpu_custom_call.1} parent=1 // pred_check
      _
    $region15: #{tpu_custom_call.1} parent=1 // pred_check_branch
      %89 = sbr.rel (0) target = $region17
    $region16: #{tpu_custom_call.1} parent=1 // pred_region
      %91 = dma.done [#allocation4], 16
    $region17: #{tpu_custom_call.1} parent=1 // pred_fallthru
      _
    %92 = vsyncpa [#allocation3], 1
    %93 = vsyncpa [#allocation4], 1

</llo_original>
